<compile_context>
chip_gen: v5e
topology: v5e:2x2
jax: 0.10.0
libtpu: 0.0.40
codegen_flags: <defaults>
</compile_context>

<pallas_src>
import functools

import numpy as np

import jax
import jax.numpy as jnp
from jax.experimental import pallas as pl
from jax.experimental.pallas import tpu as pltpu


def _reflect_upsample_selection(in_size, factor, pad):
    """0/1 matrix S of shape (in_size*factor + 2*pad, in_size).

    S[X, i] == 1 iff position X of the nearest-upsampled (by `factor`) and
    reflection-padded (by `pad`) signal reads input index i.  Valid for
    pad <= in_size*factor - 1 (always true for pad = kernel_size // 2 here).
    """
    up = in_size * factor
    X = np.arange(up + 2 * pad)
    u = np.abs(X - pad)                             # reflect at the low edge
    u = np.where(u > up - 1, 2 * (up - 1) - u, u)   # reflect at the high edge
    src = u // factor                               # nearest-neighbour source
    return (src[:, None] == np.arange(in_size)[None, :]).astype(np.float32)


def _kernel(x_ref, selw_ref, l_ref, bcol_ref, o_ref, *, KW, Cin, H, W):
    # x_ref    : (1, Cin, H, W)              raw NCHW tile for one image
    # selw_ref : (KW, W, Wout)               fused upsample + reflect-pad + kw-shift (columns)
    # l_ref    : (Cout*Hout, KW*Cin*H)       fused (row selection x conv weights) matrix
    # bcol_ref : (Cout*Hout, 1)              bias, repeated per output row
    # o_ref    : (1, Cout, Hout, Wout)       NCHW output tile
    xs = x_ref[...].reshape(Cin * H, W).astype(jnp.float32)          # (Cin*H, W)

    # Column-side: upsample + reflection pad + per-tap shift for all channels/rows at once.
    # Stack the KW tap results along rows so the final contraction is one K=KW*Cin*H matmul.
    xc = jnp.concatenate(
        [jnp.dot(xs, selw_ref[kw], preferred_element_type=jnp.float32)
         for kw in range(KW)],
        axis=0)                                                      # (KW*Cin*H, Wout)

    # Row-side selection + full (kw, kh, ci) weight contraction in ONE MXU matmul, plus bias.
    out = jnp.dot(l_ref[...], xc, preferred_element_type=jnp.float32)  # (Cout*Hout, Wout)
    out = out + bcol_ref[...]                                          # lane-broadcast bias

    o_ref[...] = out.reshape(o_ref.shape).astype(o_ref.dtype)


def upsample_conv_layer(x, weight, bias, *, kernel_size, stride, upsample=None):
    """Forward pass of UpsampleConvLayer (norm=None case).

    x      : (B, Cin, H, W)      NCHW (PyTorch layout)
    weight : (Cout, Cin, KH, KW) PyTorch Conv2d weight (OIHW)
    bias   : (Cout,)
    returns: (B, Cout, Hout, Wout) in NCHW.
    """
    B, Cin, H, W = x.shape
    Cout = weight.shape[0]
    KH = KW = kernel_size
    pad = kernel_size // 2
    factor = upsample if upsample else 1
    Hp = H * factor + 2 * pad
    Wp = W * factor + 2 * pad
    Hout = (Hp - KH) // stride + 1
    Wout = (Wp - KW) // stride + 1

    # ---- host-side constant selection matrices (fold upsample + reflect-pad + tap shifts) ----
    selH = _reflect_upsample_selection(H, factor, pad)    # (Hp, H)
    selW = _reflect_upsample_selection(W, factor, pad)    # (Wp, W)

    # selw[kw] : (W, Wout); (x_plane @ selw[kw])[h, x] = x_padded_up_cols[h, x*stride + kw]
    selw = jnp.asarray(np.stack(
        [selW[kw: kw + (Wout - 1) * stride + 1: stride, :].T for kw in range(KW)], axis=0))

    # rh[kh] : (Hout, H); rh[kh][y, h] = 1 iff row (y*stride + kh) of the padded upsampled
    # image reads input row h.
    rh = np.stack(
        [selH[kh: kh + (Hout - 1) * stride + 1: stride, :] for kh in range(KH)], axis=0)

    # ---- fold conv weights + row selection into one matmul-ready matrix ----
    # L[co*Hout + y, kw*Cin*H + ci*H + h] = sum_kh weight[co, ci, kh, kw] * rh[kh, y, h]
    L = jnp.einsum('ocrs,ryh->oysch',
                   weight.astype(jnp.float32), jnp.asarray(rh))
    L = L.reshape(Cout * Hout, KW * Cin * H)                          # (Cout*Hout, KW*Cin*H)
    bcol = jnp.repeat(bias.astype(jnp.float32), Hout)[:, None]        # (Cout*Hout, 1)

    kernel = functools.partial(_kernel, KW=KW, Cin=Cin, H=H, W=W)

    out = pl.pallas_call(
        kernel,
        out_shape=jax.ShapeDtypeStruct((B, Cout, Hout, Wout), x.dtype),
        grid_spec=pltpu.PrefetchScalarGridSpec(
            num_scalar_prefetch=0,
            grid=(B,),
            in_specs=[
                pl.BlockSpec((1, Cin, H, W), lambda b: (b, 0, 0, 0)),
                pl.BlockSpec((KW, W, Wout), lambda b: (0, 0, 0)),
                pl.BlockSpec((Cout * Hout, KW * Cin * H), lambda b: (0, 0)),
                pl.BlockSpec((Cout * Hout, 1), lambda b: (0, 0)),
            ],
            out_specs=pl.BlockSpec((1, Cout, Hout, Wout), lambda b: (b, 0, 0, 0)),
        ),
        compiler_params=pltpu.CompilerParams(
            dimension_semantics=("parallel",)),
    )(x, selw, L, bcol)

    return out


if __name__ == "__main__":
    # Module config
    in_channels, out_channels = 4, 8
    kernel_size, stride, upsample = 3, 1, 2

    key = jax.random.PRNGKey(0)
    kx, kw_, kb = jax.random.split(key, 3)

    # Deterministic synthetic parameters (PyTorch conv weight layout: OIHW).
    x = jax.random.normal(kx, (2, in_channels, 16, 16), dtype=jnp.float32)
    weight = jax.random.normal(
        kw_, (out_channels, in_channels, kernel_size, kernel_size),
        dtype=jnp.float32) * 0.1
    bias = jax.random.normal(kb, (out_channels,), dtype=jnp.float32) * 0.1

    fwd = jax.jit(functools.partial(upsample_conv_layer, kernel_size=kernel_size,
                                    stride=stride, upsample=upsample))
    out = fwd(x, weight, bias)
    out = jax.block_until_ready(out)

    # Lightweight sanity check against a pure-JAX reference (upsample -> reflect pad -> conv).
    x_up = jnp.repeat(jnp.repeat(x, upsample, axis=2), upsample, axis=3)
    x_pad = jnp.pad(x_up, ((0, 0), (0, 0), (1, 1), (1, 1)), mode="reflect")
    ref = jax.lax.conv_general_dilated(
        x_pad, weight, window_strides=(stride, stride), padding="VALID",
        dimension_numbers=("NCHW", "OIHW", "NCHW")) + bias[None, :, None, None]

    assert out.shape == ref.shape == (2, out_channels, 32, 32)
    err = float(jnp.max(jnp.abs(out - ref)))
    assert err < 2e-3, f"max abs error {err}"
    print("KERNEL_OK")
</pallas_src>

<mosaic_0001>
module attributes {stable_mosaic.version = 11 : i64} {
  func.func @_kernel(%arg0: i32, %arg1: memref<1x4x16x16xf32, #tpu.memory_space<vmem>>, %arg2: memref<3x16x32xf32, #tpu.memory_space<vmem>>, %arg3: memref<256x192xf32, #tpu.memory_space<vmem>>, %arg4: memref<256x1xf32, #tpu.memory_space<vmem>>, %arg5: memref<1x8x32x32xf32, #tpu.memory_space<vmem>>) attributes {dimension_semantics = [#tpu.dimension_semantics<parallel>], iteration_bounds = array<i64: 2>, scalar_prefetch = 0 : i64, scratch_operands = 0 : i64, tpu.core_type = #tpu.core_type<tc>, window_params = [{transform_indices = @transform_0, window_bounds = array<i64: 1, 4, 16, 16>}, {pipeline_mode = #tpu.pipeline_mode<synchronous>, transform_indices = @transform_1, window_bounds = array<i64: 3, 16, 32>}, {pipeline_mode = #tpu.pipeline_mode<synchronous>, transform_indices = @transform_2, window_bounds = array<i64: 256, 192>}, {pipeline_mode = #tpu.pipeline_mode<synchronous>, transform_indices = @transform_3, window_bounds = array<i64: 256, 1>}, {transform_indices = @transform_4, window_bounds = array<i64: 1, 8, 32, 32>}]} {
    %c0 = arith.constant 0 : index
    %c0_0 = arith.constant 0 : index
    %c0_1 = arith.constant 0 : index
    %c0_2 = arith.constant 0 : index
    %0 = vector.load %arg1[%c0, %c0_0, %c0_1, %c0_2] : memref<1x4x16x16xf32, #tpu.memory_space<vmem>>, vector<1x4x16x16xf32>
    %1 = vector.shape_cast %0 : vector<1x4x16x16xf32> to vector<64x16xf32>
    %c0_3 = arith.constant 0 : index
    %c0_4 = arith.constant 0 : index
    %c0_5 = arith.constant 0 : index
    %2 = vector.load %arg2[%c0_3, %c0_4, %c0_5] : memref<3x16x32xf32, #tpu.memory_space<vmem>>, vector<1x16x32xf32>
    %3 = vector.shape_cast %2 : vector<1x16x32xf32> to vector<16x32xf32>
    %cst = arith.constant dense<0.000000e+00> : vector<64x32xf32>
    %4 = tpu.matmul %1, %3, %cst {dimension_numbers = #tpu.dot_dimension_numbers<[1], [0], [0], [1], [0, 0, 1, 1], [], []>} : vector<64x16xf32>, vector<16x32xf32>, vector<64x32xf32> -> vector<64x32xf32>
    %c1 = arith.constant 1 : index
    %c0_6 = arith.constant 0 : index
    %c0_7 = arith.constant 0 : index
    %5 = vector.load %arg2[%c1, %c0_6, %c0_7] : memref<3x16x32xf32, #tpu.memory_space<vmem>>, vector<1x16x32xf32>
    %6 = vector.shape_cast %5 : vector<1x16x32xf32> to vector<16x32xf32>
    %cst_8 = arith.constant dense<0.000000e+00> : vector<64x32xf32>
    %7 = tpu.matmul %1, %6, %cst_8 {dimension_numbers = #tpu.dot_dimension_numbers<[1], [0], [0], [1], [0, 0, 1, 1], [], []>} : vector<64x16xf32>, vector<16x32xf32>, vector<64x32xf32> -> vector<64x32xf32>
    %c2 = arith.constant 2 : index
    %c0_9 = arith.constant 0 : index
    %c0_10 = arith.constant 0 : index
    %8 = vector.load %arg2[%c2, %c0_9, %c0_10] : memref<3x16x32xf32, #tpu.memory_space<vmem>>, vector<1x16x32xf32>
    %9 = vector.shape_cast %8 : vector<1x16x32xf32> to vector<16x32xf32>
    %cst_11 = arith.constant dense<0.000000e+00> : vector<64x32xf32>
    %10 = tpu.matmul %1, %9, %cst_11 {dimension_numbers = #tpu.dot_dimension_numbers<[1], [0], [0], [1], [0, 0, 1, 1], [], []>} : vector<64x16xf32>, vector<16x32xf32>, vector<64x32xf32> -> vector<64x32xf32>
    %11 = tpu.concatenate %4, %7, %10 in 0 : vector<64x32xf32>, vector<64x32xf32>, vector<64x32xf32> -> vector<192x32xf32>
    %c0_12 = arith.constant 0 : index
    %c0_13 = arith.constant 0 : index
    %12 = vector.load %arg3[%c0_12, %c0_13] : memref<256x192xf32, #tpu.memory_space<vmem>>, vector<256x192xf32>
    %cst_14 = arith.constant dense<0.000000e+00> : vector<256x32xf32>
    %13 = tpu.matmul %12, %11, %cst_14 {dimension_numbers = #tpu.dot_dimension_numbers<[1], [0], [0], [1], [0, 0, 1, 1], [], []>} : vector<256x192xf32>, vector<192x32xf32>, vector<256x32xf32> -> vector<256x32xf32>
    %c0_15 = arith.constant 0 : index
    %c0_16 = arith.constant 0 : index
    %14 = vector.load %arg4[%c0_15, %c0_16] : memref<256x1xf32, #tpu.memory_space<vmem>>, vector<256x1xf32>
    %15 = vector.broadcast %14 : vector<256x1xf32> to vector<256x32xf32>
    %16 = arith.addf %13, %15 : vector<256x32xf32>
    %17 = vector.shape_cast %16 : vector<256x32xf32> to vector<1x8x32x32xf32>
    %c0_17 = arith.constant 0 : index
    %c0_18 = arith.constant 0 : index
    %c0_19 = arith.constant 0 : index
    %c0_20 = arith.constant 0 : index
    %18 = vector.load %arg5[%c0_17, %c0_18, %c0_19, %c0_20] : memref<1x8x32x32xf32, #tpu.memory_space<vmem>>, vector<1x8x32x32xf32>
    tpu.vector_store %arg5[%c0_17, %c0_18, %c0_19, %c0_20], %17 {strides = array<i32>} : memref<1x8x32x32xf32, #tpu.memory_space<vmem>>, vector<1x8x32x32xf32>,
    return
  }
  func.func @transform_0(%arg0: i32) -> (i32, i32, i32, i32) {
    %c0_i32 = arith.constant 0 : i32
    %c0_i32_0 = arith.constant 0 : i32
    %c0_i32_1 = arith.constant 0 : i32
    %c0_i32_2 = arith.constant 0 : i32
    return %arg0, %c0_i32, %c0_i32_0, %c0_i32_1 : i32, i32, i32, i32
  }
  func.func @transform_1(%arg0: i32) -> (i32, i32, i32) {
    %c0_i32 = arith.constant 0 : i32
    %c0_i32_0 = arith.constant 0 : i32
    %c0_i32_1 = arith.constant 0 : i32
    %c0_i32_2 = arith.constant 0 : i32
    return %c0_i32, %c0_i32_0, %c0_i32_1 : i32, i32, i32
  }
  func.func @transform_2(%arg0: i32) -> (i32, i32) {
    %c0_i32 = arith.constant 0 : i32
    %c0_i32_0 = arith.constant 0 : i32
    %c0_i32_1 = arith.constant 0 : i32
    return %c0_i32, %c0_i32_0 : i32, i32
  }
  func.func @transform_3(%arg0: i32) -> (i32, i32) {
    %c0_i32 = arith.constant 0 : i32
    %c0_i32_0 = arith.constant 0 : i32
    %c0_i32_1 = arith.constant 0 : i32
    return %c0_i32, %c0_i32_0 : i32, i32
  }
  func.func @transform_4(%arg0: i32) -> (i32, i32, i32, i32) {
    %c0_i32 = arith.constant 0 : i32
    %c0_i32_0 = arith.constant 0 : i32
    %c0_i32_1 = arith.constant 0 : i32
    %c0_i32_2 = arith.constant 0 : i32
    return %arg0, %c0_i32, %c0_i32_0, %c0_i32_1 : i32, i32, i32, i32
  }
}

</mosaic_0001>

<llo_original>
// kernel: upsample_conv_layer.1
$region0: #{upsample_conv_layer.1}
  #allocation0 [shape = 'u32[]', space=smem, size = 0x4, offset = 0x4, fixed_abs, tag = 'smem constant byte address 0x4 - core index']
  #allocation1 [shape = 'u32[72,128]{1,0:T(1,128)}', space=vmem, size = 0x9000, scoped, tag = 'internal scratch']
  %s0 = inlined_call_operand.vmem [shape: f32[2,4,16,16], index: 0, kind: input, shape index: {}]
  %s1 = inlined_call_operand.vmem [shape: f32[3,16,32], index: 1, kind: input, shape index: {}]
  %s2 = inlined_call_operand.vmem [shape: f32[256,192], index: 2, kind: input, shape index: {}]
  %s3 = inlined_call_operand.vmem [shape: f32[256,1], index: 3, kind: input, shape index: {}]
  %s4 = inlined_call_operand.hbm [shape: f32[2,8,32,32], index: 4, kind: output, shape index: {}]
  %s5 = sld [smem:[#allocation0]]
  $region49: #{upsample_conv_layer.1} parent=0
    _
  %s7 = ssub.s32 1, %s5
  %s8 = scalar_select 0, %s7, %s5
  $region1: #{upsample_conv_layer.1} parent=0
    #allocation2 [shape = 'u8[262144]{0}', space=vmem, size = 0x40000, scoped, tag = 'output window, operand 0']
    #allocation3 [shape = 's32[2]{0}', space=sflag, size = 0x8, scoped, tag = 'scoped memory for upsample_conv_layer.1']
    %9 = vsyncpa [#allocation3], 0
    %s10 = scalar_lea.sflag [#allocation3], 1
    %11 = vsyncpa %s10, 0
    loop: start=0, step=1, limit=4
    $region2: #{upsample_conv_layer.1} parent=1 // loop_pre_header
      _
    $region3: #{upsample_conv_layer.1} parent=1 // loop_header
      %s13 = sphi 0, %s17
      %p14 = scmp.ge.s32.totalorder %s13, 4
      %s23 = sphi 0, %s25
      %s26 = sphi 0, %s23
      %s27 = sphi 0, %s26
      %s43 = sphi 0, %s27
      %s47 = sphi 0, %s47
      %s49 = sphi 0, %s47
      %s50 = sphi 0, %s49
      %s64 = sphi 0, %s50
      %s68 = sphi 0, %s68
      %s70 = sphi 0, %s68
      %s71 = sphi 0, %s70
      %s85 = sphi 0, %s71
      %s89 = sphi 0, %s89
      %s91 = sphi 0, %s89
      %s92 = sphi 0, %s91
      %s106 = sphi 0, %s92
      %s112 = sphi 0, %s114
      %s115 = sphi 0, %s112
      %s116 = sphi 0, %s115
      %s132 = sphi 0, %s116
    $region4: #{upsample_conv_layer.1} parent=1 // loop_header_branch
      %16 = sbr.rel (%p14) target = $region8
    $region5: #{upsample_conv_layer.1} parent=1 // loop_body
      %s18 = ssub.s32 %s13, 1
      %s19 = ssub.s32 %s13, 2
      %s20 = sadd.s32 %s13, 1
      %s21 = ssub.s32 %s13, %s20
      %p22 = scmp.eq.s32.totalorder %s21, 0
      %s24 = sadd.s32 %s23, 1
      %s25 = scalar_select %p22, %s23, %s24
      %p28 = pneg %p22
      %p29 = scmp.eq.s32.totalorder %s13, 1
      %p30 = por %p28, %p29
      %p31 = scmp.ne.s32.totalorder %s23, %s26
      %p32 = scmp.eq.s32.totalorder %s13, 0
      %p33 = por %p31, %p32
      %p34 = scmp.ne.s32.totalorder %s23, %s26
      %p35 = scmp.eq.s32.totalorder %s18, 1
      %p36 = por %p34, %p35
      %p37 = scmp.ne.s32.totalorder %s26, %s27
      %p38 = scmp.eq.s32.totalorder %s18, 0
      %p39 = por %p37, %p38
      %p40 = scmp.ne.s32.totalorder %s26, %s27
      %p41 = scmp.eq.s32.totalorder %s19, 1
      %p42 = por %p40, %p41
      %p44 = scmp.ne.s32.totalorder %s27, %s43
      %p45 = scmp.eq.s32.totalorder %s19, 0
      %p46 = por %p44, %p45
      %s48 = sadd.s32 %s47, 1
      %p51 = scmp.eq.s32.totalorder %s13, 1
      %p52 = scmp.ne.s32.totalorder %s47, %s49
      %p53 = scmp.eq.s32.totalorder %s13, 0
      %p54 = por %p52, %p53
      %p55 = scmp.ne.s32.totalorder %s47, %s49
      %p56 = scmp.eq.s32.totalorder %s18, 1
      %p57 = por %p55, %p56
      %p58 = scmp.ne.s32.totalorder %s49, %s50
      %p59 = scmp.eq.s32.totalorder %s18, 0
      %p60 = por %p58, %p59
      %p61 = scmp.ne.s32.totalorder %s49, %s50
      %p62 = scmp.eq.s32.totalorder %s19, 1
      %p63 = por %p61, %p62
      %p65 = scmp.ne.s32.totalorder %s50, %s64
      %p66 = scmp.eq.s32.totalorder %s19, 0
      %p67 = por %p65, %p66
      %s69 = sadd.s32 %s68, 1
      %p72 = scmp.eq.s32.totalorder %s13, 1
      %p73 = scmp.ne.s32.totalorder %s68, %s70
      %p74 = scmp.eq.s32.totalorder %s13, 0
      %p75 = por %p73, %p74
      %p76 = scmp.ne.s32.totalorder %s68, %s70
      %p77 = scmp.eq.s32.totalorder %s18, 1
      %p78 = por %p76, %p77
      %p79 = scmp.ne.s32.totalorder %s70, %s71
      %p80 = scmp.eq.s32.totalorder %s18, 0
      %p81 = por %p79, %p80
      %p82 = scmp.ne.s32.totalorder %s70, %s71
      %p83 = scmp.eq.s32.totalorder %s19, 1
      %p84 = por %p82, %p83
      %p86 = scmp.ne.s32.totalorder %s71, %s85
      %p87 = scmp.eq.s32.totalorder %s19, 0
      %p88 = por %p86, %p87
      %s90 = sadd.s32 %s89, 1
      %p93 = scmp.eq.s32.totalorder %s13, 1
      %p94 = scmp.ne.s32.totalorder %s89, %s91
      %p95 = scmp.eq.s32.totalorder %s13, 0
      %p96 = por %p94, %p95
      %p97 = scmp.ne.s32.totalorder %s89, %s91
      %p98 = scmp.eq.s32.totalorder %s18, 1
      %p99 = por %p97, %p98
      %p100 = scmp.ne.s32.totalorder %s91, %s92
      %p101 = scmp.eq.s32.totalorder %s18, 0
      %p102 = por %p100, %p101
      %p103 = scmp.ne.s32.totalorder %s91, %s92
      %p104 = scmp.eq.s32.totalorder %s19, 1
      %p105 = por %p103, %p104
      %p107 = scmp.ne.s32.totalorder %s92, %s106
      %p108 = scmp.eq.s32.totalorder %s19, 0
      %p109 = por %p107, %p108
      %s110 = ssub.s32 %s13, %s20
      %p111 = scmp.eq.s32.totalorder %s110, 0
      %s113 = sadd.s32 %s112, 1
      %s114 = scalar_select %p111, %s112, %s113
      %p117 = pneg %p111
      %p118 = scmp.eq.s32.totalorder %s13, 1
      %p119 = por %p117, %p118
      %p120 = scmp.ne.s32.totalorder %s112, %s115
      %p121 = scmp.eq.s32.totalorder %s13, 0
      %p122 = por %p120, %p121
      %p123 = scmp.ne.s32.totalorder %s112, %s115
      %p124 = scmp.eq.s32.totalorder %s18, 1
      %p125 = por %p123, %p124
      %p126 = scmp.ne.s32.totalorder %s115, %s116
      %p127 = scmp.eq.s32.totalorder %s18, 0
      %p128 = por %p126, %p127
      %p129 = scmp.ne.s32.totalorder %s115, %s116
      %p130 = scmp.eq.s32.totalorder %s19, 1
      %p131 = por %p129, %p130
      %p133 = scmp.ne.s32.totalorder %s116, %s132
      %p134 = scmp.eq.s32.totalorder %s19, 0
      %p135 = por %p133, %p134
      %p136 = scmp.le.s32.totalorder 1, %s13
      %p137 = scmp.lt.s32.totalorder %s13, 3
      %p138 = pnand %p136, %p137
      %p139 = pneg %p138
      // Predicated region
      $region9: #{upsample_conv_layer.1} parent=5 // pred_check
        _
      $region10: #{upsample_conv_layer.1} parent=5 // pred_check_branch
        %141 = sbr.rel (%p138) target = $region12
      $region11: #{upsample_conv_layer.1} parent=5 // pred_region
        %s142 = ssub.s32 %s13, 1
        // Predicated region
        $region13: #{upsample_conv_layer.1} parent=11 // pred_check
          %p143 = pneg %p60
        $region14: #{upsample_conv_layer.1} parent=11 // pred_check_branch
          %145 = sbr.rel (%p143) target = $region16
        $region15: #{upsample_conv_layer.1} parent=11 // pred_region
          _
        $region16: #{upsample_conv_layer.1} parent=11 // pred_fallthru
          _
        // Predicated region
        $region17: #{upsample_conv_layer.1} parent=11 // pred_check
          %p146 = pneg %p81
        $region18: #{upsample_conv_layer.1} parent=11 // pred_check_branch
          %148 = sbr.rel (%p146) target = $region20
        $region19: #{upsample_conv_layer.1} parent=11 // pred_region
          _
        $region20: #{upsample_conv_layer.1} parent=11 // pred_fallthru
          _
        // Predicated region
        $region21: #{upsample_conv_layer.1} parent=11 // pred_check
          %p149 = pneg %p102
        $region22: #{upsample_conv_layer.1} parent=11 // pred_check_branch
          %151 = sbr.rel (%p149) target = $region24
        $region23: #{upsample_conv_layer.1} parent=11 // pred_region
          _
        $region24: #{upsample_conv_layer.1} parent=11 // pred_fallthru
          _
      $region12: #{upsample_conv_layer.1} parent=5 // pred_fallthru
        _
      %p152 = scmp.lt.s32.totalorder %s13, 2
      // Predicated region
      $region25: #{upsample_conv_layer.1} parent=5 // pred_check
        %p153 = pneg %p152
      $region26: #{upsample_conv_layer.1} parent=5 // pred_check_branch
        %155 = sbr.rel (%p153) target = $region28
      $region27: #{upsample_conv_layer.1} parent=5 // pred_region
        // Predicated region
        $region29: #{upsample_conv_layer.1} parent=27 // pred_check
          %p156 = pneg %p33
        $region30: #{upsample_conv_layer.1} parent=27 // pred_check_branch
          %158 = sbr.rel (%p156) target = $region32
        $region31: #{upsample_conv_layer.1} parent=27 // pred_region
          %p159 = scmp.lt.s32.totalorder %s13, 1
          %s160 = scalar_select %p159, %s13, 1
          %s161 = smul.addr %s160, 8
          %s162 = smul.addr %s161, 8
          %s163 = scalar_lea.vmem %s0, %s162
        $region32: #{upsample_conv_layer.1} parent=27 // pred_fallthru
          _
      $region28: #{upsample_conv_layer.1} parent=5 // pred_fallthru
        _
      %p164 = scmp.le.s32.totalorder 1, %s13
      %p165 = scmp.lt.s32.totalorder %s13, 3
      %p166 = pnand %p164, %p165
      %p167 = pneg %p166
      // Predicated region
      $region33: #{upsample_conv_layer.1} parent=5 // pred_check
        _
      $region34: #{upsample_conv_layer.1} parent=5 // pred_check_branch
        %169 = sbr.rel (%p166) target = $region36
      $region35: #{upsample_conv_layer.1} parent=5 // pred_region
        %s170 = ssub.s32 %s13, 1
        %p171 = scmp.lt.s32.totalorder %s18, 1
        %s172 = scalar_select %p171, %s18, 1
        %s173 = smul.addr %s172, 8
        %s174 = smul.addr %s173, 8
        %s175 = scalar_lea.vmem %s0, %s174
        %p176 = pneg %p39
        %p177 = pneg %p36
        %p178 = pneg %p60
        %p179 = pneg %p57
        %p180 = pneg %p81
        %p181 = pneg %p78
        %p182 = pneg %p102
        %p183 = pneg %p99
        %p184 = pneg %p128
        %p185 = pneg %p125
        %s186 = sand.u32 %s115, 1
        %s187 = scalar_lea.sflag [#allocation3], %s186
        %s188 = sand.u32 %s115, 1
        %s189 = smul.addr %s188, 256
        %s190 = scalar_lea.vmem [#allocation2], %s189
        %p191 = scmp.lt.s32.totalorder %s18, 1
        %s192 = scalar_select %p191, %s18, 1
        %s193 = smul.addr %s192, 8
        %s194 = smul.addr %s193, 8
        %s195 = scalar_lea.vmem %s0, %s194
        %v196 = vld [vmem:[%s195] sm:$0xff]
        %v197 = vld [vmem:[%s195 + $0x8] sm:$0xff]
        %v198 = vld [vmem:[%s195 + $0x10] sm:$0xff]
        %v199 = vld [vmem:[%s195 + $0x18] sm:$0xff]
        %v200 = vld [vmem:[%s195 + $0x20] sm:$0xff]
        %v201 = vld [vmem:[%s195 + $0x28] sm:$0xff]
        %v202 = vld [vmem:[%s195 + $0x30] sm:$0xff]
        %v203 = vld [vmem:[%s195 + $0x38] sm:$0xff]
        %v204 = vld [vmem:[%s1] sm:$0xff]
        %v205 = vld [vmem:[%s1 + $0x8] sm:$0xff]
        %vm206 = vcmask 130048
        %v208 = vsel %vm206, %v196, 0
        %v211 = vsel %vm206, %v197, 0
        %v214 = vsel %vm206, %v198, 0
        %v217 = vsel %vm206, %v199, 0
        %v220 = vsel %vm206, %v200, 0
        %v223 = vsel %vm206, %v201, 0
        %v226 = vsel %vm206, %v202, 0
        %v229 = vsel %vm206, %v203, 0
        %231 = vmatpush.msra.mxu0 0.0
        %232 = vmatpush.msra.mxu0 0.0
        %233 = vmatpush.msra.mxu0 0.0
        %234 = vmatpush.msra.mxu0 0.0
        %235 = vmatpush.msra.mxu0 0.0
        %236 = vmatpush.msra.mxu0 0.0
        %237 = vmatpush.msra.mxu0 0.0
        %238 = vmatpush.msra.mxu0 0.0
        %239 = vmatpush.msra.mxu0 0.0
        %240 = vmatpush.msra.mxu0 0.0
        %241 = vmatpush.msra.mxu0 0.0
        %242 = vmatpush.msra.mxu0 0.0
        %243 = vmatpush.msra.mxu0 0.0
        %244 = vmatpush.msra.mxu0 0.0
        %245 = vmatpush.msra.mxu0 %v205
        %246 = vmatpush.msra.mxu0 %v204
        %247 = vmatmul.f32.gmra.mxu0 %v208
        %v248 = vpop.f32.mrf.mxu0
        %v249 = vadd.f32 0.0, %v248
        %250 = vmatmul.f32.gmra.mxu0 %v211
        %v251 = vpop.f32.mrf.mxu0
        %v252 = vadd.f32 0.0, %v251
        %253 = vmatmul.f32.gmra.mxu0 %v214
        %v254 = vpop.f32.mrf.mxu0
        %v255 = vadd.f32 0.0, %v254
        %256 = vmatmul.f32.gmra.mxu0 %v217
        %v257 = vpop.f32.mrf.mxu0
        %v258 = vadd.f32 0.0, %v257
        %259 = vmatmul.f32.gmra.mxu0 %v220
        %v260 = vpop.f32.mrf.mxu0
        %v261 = vadd.f32 0.0, %v260
        %262 = vmatmul.f32.gmra.mxu0 %v223
        %v263 = vpop.f32.mrf.mxu0
        %v264 = vadd.f32 0.0, %v263
        %265 = vmatmul.f32.gmra.mxu0 %v226
        %v266 = vpop.f32.mrf.mxu0
        %v267 = vadd.f32 0.0, %v266
        %268 = vmatmul.f32.gmra.mxu0 %v229
        %v269 = vpop.f32.mrf.mxu0
        %v270 = vadd.f32 0.0, %v269
        %271 = vdwg.mxu0
        %s272 = scalar_lea.vmem %s1, 16
        %v273 = vld [vmem:[%s272] sm:$0xff]
        %v274 = vld [vmem:[%s272 + $0x8] sm:$0xff]
        %275 = vmatpush.msra.mxu0 0.0
        %276 = vmatpush.msra.mxu0 0.0
        %277 = vmatpush.msra.mxu0 0.0
        %278 = vmatpush.msra.mxu0 0.0
        %279 = vmatpush.msra.mxu0 0.0
        %280 = vmatpush.msra.mxu0 0.0
        %281 = vmatpush.msra.mxu0 0.0
        %282 = vmatpush.msra.mxu0 0.0
        %283 = vmatpush.msra.mxu0 0.0
        %284 = vmatpush.msra.mxu0 0.0
        %285 = vmatpush.msra.mxu0 0.0
        %286 = vmatpush.msra.mxu0 0.0
        %287 = vmatpush.msra.mxu0 0.0
        %288 = vmatpush.msra.mxu0 0.0
        %289 = vmatpush.msra.mxu0 %v274
        %290 = vmatpush.msra.mxu0 %v273
        %291 = vmatmul.f32.gmra.mxu0 %v208
        %v292 = vpop.f32.mrf.mxu0
        %v293 = vadd.f32 0.0, %v292
        %294 = vmatmul.f32.gmra.mxu0 %v211
        %v295 = vpop.f32.mrf.mxu0
        %v296 = vadd.f32 0.0, %v295
        %297 = vmatmul.f32.gmra.mxu0 %v214
        %v298 = vpop.f32.mrf.mxu0
        %v299 = vadd.f32 0.0, %v298
        %300 = vmatmul.f32.gmra.mxu0 %v217
        %v301 = vpop.f32.mrf.mxu0
        %v302 = vadd.f32 0.0, %v301
        %303 = vmatmul.f32.gmra.mxu0 %v220
        %v304 = vpop.f32.mrf.mxu0
        %v305 = vadd.f32 0.0, %v304
        %306 = vmatmul.f32.gmra.mxu0 %v223
        %v307 = vpop.f32.mrf.mxu0
        %v308 = vadd.f32 0.0, %v307
        %309 = vmatmul.f32.gmra.mxu0 %v226
        %v310 = vpop.f32.mrf.mxu0
        %v311 = vadd.f32 0.0, %v310
        %312 = vmatmul.f32.gmra.mxu0 %v229
        %v313 = vpop.f32.mrf.mxu0
        %v314 = vadd.f32 0.0, %v313
        %315 = vdwg.mxu0
        %s316 = scalar_lea.vmem %s1, 32
        %v317 = vld [vmem:[%s316] sm:$0xff]
        %v318 = vld [vmem:[%s316 + $0x8] sm:$0xff]
        %319 = vmatpush.msra.mxu0 0.0
        %320 = vmatpush.msra.mxu0 0.0
        %321 = vmatpush.msra.mxu0 0.0
        %322 = vmatpush.msra.mxu0 0.0
        %323 = vmatpush.msra.mxu0 0.0
        %324 = vmatpush.msra.mxu0 0.0
        %325 = vmatpush.msra.mxu0 0.0
        %326 = vmatpush.msra.mxu0 0.0
        %327 = vmatpush.msra.mxu0 0.0
        %328 = vmatpush.msra.mxu0 0.0
        %329 = vmatpush.msra.mxu0 0.0
        %330 = vmatpush.msra.mxu0 0.0
        %331 = vmatpush.msra.mxu0 0.0
        %332 = vmatpush.msra.mxu0 0.0
        %333 = vmatpush.msra.mxu0 %v318
        %334 = vmatpush.msra.mxu0 %v317
        %335 = vmatmul.f32.gmra.mxu0 %v208
        %v336 = vpop.f32.mrf.mxu0
        %v337 = vadd.f32 0.0, %v336
        %338 = vmatmul.f32.gmra.mxu0 %v211
        %v339 = vpop.f32.mrf.mxu0
        %v340 = vadd.f32 0.0, %v339
        %341 = vmatmul.f32.gmra.mxu0 %v214
        %v342 = vpop.f32.mrf.mxu0
        %v343 = vadd.f32 0.0, %v342
        %344 = vmatmul.f32.gmra.mxu0 %v217
        %v345 = vpop.f32.mrf.mxu0
        %v346 = vadd.f32 0.0, %v345
        %347 = vmatmul.f32.gmra.mxu0 %v220
        %v348 = vpop.f32.mrf.mxu0
        %v349 = vadd.f32 0.0, %v348
        %350 = vmatmul.f32.gmra.mxu0 %v223
        %v351 = vpop.f32.mrf.mxu0
        %v352 = vadd.f32 0.0, %v351
        %353 = vmatmul.f32.gmra.mxu0 %v226
        %v354 = vpop.f32.mrf.mxu0
        %v355 = vadd.f32 0.0, %v354
        %356 = vmatmul.f32.gmra.mxu0 %v229
        %v357 = vpop.f32.mrf.mxu0
        %v358 = vadd.f32 0.0, %v357
        %359 = vdwg.mxu0
        %v360 = vld [vmem:[%s2] sm:$0xff]
        %v361 = vld [vmem:[%s2 + $0x8] sm:$0xff]
        %v362 = vld [vmem:[%s2 + $0x10] sm:$0xff]
        %v363 = vld [vmem:[%s2 + $0x18] sm:$0xff]
        %v364 = vld [vmem:[%s2 + $0x20] sm:$0xff]
        %v365 = vld [vmem:[%s2 + $0x28] sm:$0xff]
        %v366 = vld [vmem:[%s2 + $0x30] sm:$0xff]
        %v367 = vld [vmem:[%s2 + $0x38] sm:$0xff]
        %v368 = vld [vmem:[%s2 + $0x40] sm:$0xff]
        %v369 = vld [vmem:[%s2 + $0x48] sm:$0xff]
        %v370 = vld [vmem:[%s2 + $0x50] sm:$0xff]
        %v371 = vld [vmem:[%s2 + $0x58] sm:$0xff]
        %v372 = vld [vmem:[%s2 + $0x60] sm:$0xff]
        %v373 = vld [vmem:[%s2 + $0x68] sm:$0xff]
        %v374 = vld [vmem:[%s2 + $0x70] sm:$0xff]
        %v375 = vld [vmem:[%s2 + $0x78] sm:$0xff]
        %v376 = vld [vmem:[%s2 + $0x80] sm:$0xff]
        %v377 = vld [vmem:[%s2 + $0x88] sm:$0xff]
        %v378 = vld [vmem:[%s2 + $0x90] sm:$0xff]
        %v379 = vld [vmem:[%s2 + $0x98] sm:$0xff]
        %v380 = vld [vmem:[%s2 + $0xa0] sm:$0xff]
        %v381 = vld [vmem:[%s2 + $0xa8] sm:$0xff]
        %v382 = vld [vmem:[%s2 + $0xb0] sm:$0xff]
        %v383 = vld [vmem:[%s2 + $0xb8] sm:$0xff]
        %v384 = vld [vmem:[%s2 + $0xc0] sm:$0xff]
        %v385 = vld [vmem:[%s2 + $0xc8] sm:$0xff]
        %v386 = vld [vmem:[%s2 + $0xd0] sm:$0xff]
        %v387 = vld [vmem:[%s2 + $0xd8] sm:$0xff]
        %v388 = vld [vmem:[%s2 + $0xe0] sm:$0xff]
        %v389 = vld [vmem:[%s2 + $0xe8] sm:$0xff]
        %v390 = vld [vmem:[%s2 + $0xf0] sm:$0xff]
        %v391 = vld [vmem:[%s2 + $0xf8] sm:$0xff]
        %v392 = vld [vmem:[%s2 + $0x100] sm:$0xff]
        %v393 = vld [vmem:[%s2 + $0x108] sm:$0xff]
        %v394 = vld [vmem:[%s2 + $0x110] sm:$0xff]
        %v395 = vld [vmem:[%s2 + $0x118] sm:$0xff]
        %v396 = vld [vmem:[%s2 + $0x120] sm:$0xff]
        %v397 = vld [vmem:[%s2 + $0x128] sm:$0xff]
        %v398 = vld [vmem:[%s2 + $0x130] sm:$0xff]
        %v399 = vld [vmem:[%s2 + $0x138] sm:$0xff]
        %v400 = vld [vmem:[%s2 + $0x140] sm:$0xff]
        %v401 = vld [vmem:[%s2 + $0x148] sm:$0xff]
        %v402 = vld [vmem:[%s2 + $0x150] sm:$0xff]
        %v403 = vld [vmem:[%s2 + $0x158] sm:$0xff]
        %v404 = vld [vmem:[%s2 + $0x160] sm:$0xff]
        %v405 = vld [vmem:[%s2 + $0x168] sm:$0xff]
        %v406 = vld [vmem:[%s2 + $0x170] sm:$0xff]
        %v407 = vld [vmem:[%s2 + $0x178] sm:$0xff]
        %v408 = vld [vmem:[%s2 + $0x180] sm:$0xff]
        %v409 = vld [vmem:[%s2 + $0x188] sm:$0xff]
        %v410 = vld [vmem:[%s2 + $0x190] sm:$0xff]
        %v411 = vld [vmem:[%s2 + $0x198] sm:$0xff]
        %v412 = vld [vmem:[%s2 + $0x1a0] sm:$0xff]
        %v413 = vld [vmem:[%s2 + $0x1a8] sm:$0xff]
        %v414 = vld [vmem:[%s2 + $0x1b0] sm:$0xff]
        %v415 = vld [vmem:[%s2 + $0x1b8] sm:$0xff]
        %v416 = vld [vmem:[%s2 + $0x1c0] sm:$0xff]
        %v417 = vld [vmem:[%s2 + $0x1c8] sm:$0xff]
        %v418 = vld [vmem:[%s2 + $0x1d0] sm:$0xff]
        %v419 = vld [vmem:[%s2 + $0x1d8] sm:$0xff]
        %v420 = vld [vmem:[%s2 + $0x1e0] sm:$0xff]
        %v421 = vld [vmem:[%s2 + $0x1e8] sm:$0xff]
        %v422 = vld [vmem:[%s2 + $0x1f0] sm:$0xff]
        %v423 = vld [vmem:[%s2 + $0x1f8] sm:$0xff]
        %v424 = vld [vmem:[%s3] sm:$0xff]
        %v425 = vld [vmem:[%s3 + $0x8] sm:$0xff]
        %v426 = vld [vmem:[%s3 + $0x10] sm:$0xff]
        %v427 = vld [vmem:[%s3 + $0x18] sm:$0xff]
        %v428 = vld [vmem:[%s3 + $0x20] sm:$0xff]
        %v429 = vld [vmem:[%s3 + $0x28] sm:$0xff]
        %v430 = vld [vmem:[%s3 + $0x30] sm:$0xff]
        %v431 = vld [vmem:[%s3 + $0x38] sm:$0xff]
        %v432 = vld [vmem:[%s3 + $0x40] sm:$0xff]
        %v433 = vld [vmem:[%s3 + $0x48] sm:$0xff]
        %v434 = vld [vmem:[%s3 + $0x50] sm:$0xff]
        %v435 = vld [vmem:[%s3 + $0x58] sm:$0xff]
        %v436 = vld [vmem:[%s3 + $0x60] sm:$0xff]
        %v437 = vld [vmem:[%s3 + $0x68] sm:$0xff]
        %v438 = vld [vmem:[%s3 + $0x70] sm:$0xff]
        %v439 = vld [vmem:[%s3 + $0x78] sm:$0xff]
        %v440 = vld [vmem:[%s3 + $0x80] sm:$0xff]
        %v441 = vld [vmem:[%s3 + $0x88] sm:$0xff]
        %v442 = vld [vmem:[%s3 + $0x90] sm:$0xff]
        %v443 = vld [vmem:[%s3 + $0x98] sm:$0xff]
        %v444 = vld [vmem:[%s3 + $0xa0] sm:$0xff]
        %v445 = vld [vmem:[%s3 + $0xa8] sm:$0xff]
        %v446 = vld [vmem:[%s3 + $0xb0] sm:$0xff]
        %v447 = vld [vmem:[%s3 + $0xb8] sm:$0xff]
        %v448 = vld [vmem:[%s3 + $0xc0] sm:$0xff]
        %v449 = vld [vmem:[%s3 + $0xc8] sm:$0xff]
        %v450 = vld [vmem:[%s3 + $0xd0] sm:$0xff]
        %v451 = vld [vmem:[%s3 + $0xd8] sm:$0xff]
        %v452 = vld [vmem:[%s3 + $0xe0] sm:$0xff]
        %v453 = vld [vmem:[%s3 + $0xe8] sm:$0xff]
        %v454 = vld [vmem:[%s3 + $0xf0] sm:$0xff]
        %v455 = vld [vmem:[%s3 + $0xf8] sm:$0xff]
        %457 = vset.pattern.permute.xlu0 0
        %458 = vperm.xlu0 %457, %v424
        %v459 = vpop.permute.xlu0 %458
        %462 = vset.pattern.permute.xlu0 0
        %463 = vperm.xlu0 %462, %v425
        %v464 = vpop.permute.xlu0 %463
        %467 = vset.pattern.permute.xlu0 0
        %468 = vperm.xlu0 %467, %v426
        %v469 = vpop.permute.xlu0 %468
        %472 = vset.pattern.permute.xlu0 0
        %473 = vperm.xlu0 %472, %v427
        %v474 = vpop.permute.xlu0 %473
        %477 = vset.pattern.permute.xlu0 0
        %478 = vperm.xlu0 %477, %v428
        %v479 = vpop.permute.xlu0 %478
        %482 = vset.pattern.permute.xlu0 0
        %483 = vperm.xlu0 %482, %v429
        %v484 = vpop.permute.xlu0 %483
        %487 = vset.pattern.permute.xlu0 0
        %488 = vperm.xlu0 %487, %v430
        %v489 = vpop.permute.xlu0 %488
        %492 = vset.pattern.permute.xlu0 0
        %493 = vperm.xlu0 %492, %v431
        %v494 = vpop.permute.xlu0 %493
        %497 = vset.pattern.permute.xlu0 0
        %498 = vperm.xlu0 %497, %v432
        %v499 = vpop.permute.xlu0 %498
        %502 = vset.pattern.permute.xlu0 0
        %503 = vperm.xlu0 %502, %v433
        %v504 = vpop.permute.xlu0 %503
        %507 = vset.pattern.permute.xlu0 0
        %508 = vperm.xlu0 %507, %v434
        %v509 = vpop.permute.xlu0 %508
        %512 = vset.pattern.permute.xlu0 0
        %513 = vperm.xlu0 %512, %v435
        %v514 = vpop.permute.xlu0 %513
        %517 = vset.pattern.permute.xlu0 0
        %518 = vperm.xlu0 %517, %v436
        %v519 = vpop.permute.xlu0 %518
        %522 = vset.pattern.permute.xlu0 0
        %523 = vperm.xlu0 %522, %v437
        %v524 = vpop.permute.xlu0 %523
        %527 = vset.pattern.permute.xlu0 0
        %528 = vperm.xlu0 %527, %v438
        %v529 = vpop.permute.xlu0 %528
        %532 = vset.pattern.permute.xlu0 0
        %533 = vperm.xlu0 %532, %v439
        %v534 = vpop.permute.xlu0 %533
        %537 = vset.pattern.permute.xlu0 0
        %538 = vperm.xlu0 %537, %v440
        %v539 = vpop.permute.xlu0 %538
        %542 = vset.pattern.permute.xlu0 0
        %543 = vperm.xlu0 %542, %v441
        %v544 = vpop.permute.xlu0 %543
        %547 = vset.pattern.permute.xlu0 0
        %548 = vperm.xlu0 %547, %v442
        %v549 = vpop.permute.xlu0 %548
        %552 = vset.pattern.permute.xlu0 0
        %553 = vperm.xlu0 %552, %v443
        %v554 = vpop.permute.xlu0 %553
        %557 = vset.pattern.permute.xlu0 0
        %558 = vperm.xlu0 %557, %v444
        %v559 = vpop.permute.xlu0 %558
        %562 = vset.pattern.permute.xlu0 0
        %563 = vperm.xlu0 %562, %v445
        %v564 = vpop.permute.xlu0 %563
        %567 = vset.pattern.permute.xlu0 0
        %568 = vperm.xlu0 %567, %v446
        %v569 = vpop.permute.xlu0 %568
        %572 = vset.pattern.permute.xlu0 0
        %573 = vperm.xlu0 %572, %v447
        %v574 = vpop.permute.xlu0 %573
        %577 = vset.pattern.permute.xlu0 0
        %578 = vperm.xlu0 %577, %v448
        %v579 = vpop.permute.xlu0 %578
        %582 = vset.pattern.permute.xlu0 0
        %583 = vperm.xlu0 %582, %v449
        %v584 = vpop.permute.xlu0 %583
        %587 = vset.pattern.permute.xlu0 0
        %588 = vperm.xlu0 %587, %v450
        %v589 = vpop.permute.xlu0 %588
        %592 = vset.pattern.permute.xlu0 0
        %593 = vperm.xlu0 %592, %v451
        %v594 = vpop.permute.xlu0 %593
        %597 = vset.pattern.permute.xlu0 0
        %598 = vperm.xlu0 %597, %v452
        %v599 = vpop.permute.xlu0 %598
        %602 = vset.pattern.permute.xlu0 0
        %603 = vperm.xlu0 %602, %v453
        %v604 = vpop.permute.xlu0 %603
        %607 = vset.pattern.permute.xlu0 0
        %608 = vperm.xlu0 %607, %v454
        %v609 = vpop.permute.xlu0 %608
        %612 = vset.pattern.permute.xlu0 0
        %613 = vperm.xlu0 %612, %v455
        %v614 = vpop.permute.xlu0 %613
        %vm616 = vcmask 523264
        %v618 = vsel %vm616, %v361, 0
        %v621 = vsel %vm616, %v363, 0
        %v624 = vsel %vm616, %v365, 0
        %v627 = vsel %vm616, %v367, 0
        %v630 = vsel %vm616, %v369, 0
        %v633 = vsel %vm616, %v371, 0
        %v636 = vsel %vm616, %v373, 0
        %v639 = vsel %vm616, %v375, 0
        %v642 = vsel %vm616, %v377, 0
        %v645 = vsel %vm616, %v379, 0
        %v648 = vsel %vm616, %v381, 0
        %v651 = vsel %vm616, %v383, 0
        %v654 = vsel %vm616, %v385, 0
        %v657 = vsel %vm616, %v387, 0
        %v660 = vsel %vm616, %v389, 0
        %v663 = vsel %vm616, %v391, 0
        %v666 = vsel %vm616, %v393, 0
        %v669 = vsel %vm616, %v395, 0
        %v672 = vsel %vm616, %v397, 0
        %v675 = vsel %vm616, %v399, 0
        %v678 = vsel %vm616, %v401, 0
        %v681 = vsel %vm616, %v403, 0
        %v684 = vsel %vm616, %v405, 0
        %v687 = vsel %vm616, %v407, 0
        %v690 = vsel %vm616, %v409, 0
        %v693 = vsel %vm616, %v411, 0
        %v696 = vsel %vm616, %v413, 0
        %v699 = vsel %vm616, %v415, 0
        %v702 = vsel %vm616, %v417, 0
        %v705 = vsel %vm616, %v419, 0
        %v708 = vsel %vm616, %v421, 0
        %v711 = vsel %vm616, %v423, 0
        %713 = vmatpush.msra.mxu0 %v314
        %714 = vmatpush.msra.mxu0 %v311
        %715 = vmatpush.msra.mxu0 %v308
        %716 = vmatpush.msra.mxu0 %v305
        %717 = vmatpush.msra.mxu0 %v302
        %718 = vmatpush.msra.mxu0 %v299
        %719 = vmatpush.msra.mxu0 %v296
        %720 = vmatpush.msra.mxu0 %v293
        %721 = vmatpush.msra.mxu0 %v270
        %722 = vmatpush.msra.mxu0 %v267
        %723 = vmatpush.msra.mxu0 %v264
        %724 = vmatpush.msra.mxu0 %v261
        %725 = vmatpush.msra.mxu0 %v258
        %726 = vmatpush.msra.mxu0 %v255
        %727 = vmatpush.msra.mxu0 %v252
        %728 = vmatpush.msra.mxu0 %v249
        %729 = vmatmul.f32.gmra.mxu0 %v360
        %v730 = vpop.f32.mrf.mxu0
        %v731 = vadd.f32 %v459, %v730
        %732 = vmatmul.f32.gmra.mxu0 %v362
        %v733 = vpop.f32.mrf.mxu0
        %v734 = vadd.f32 %v464, %v733
        %735 = vmatmul.f32.gmra.mxu0 %v364
        %v736 = vpop.f32.mrf.mxu0
        %v737 = vadd.f32 %v469, %v736
        %738 = vmatmul.f32.gmra.mxu0 %v366
        %v739 = vpop.f32.mrf.mxu0
        %v740 = vadd.f32 %v474, %v739
        %741 = vmatmul.f32.gmra.mxu0 %v368
        %v742 = vpop.f32.mrf.mxu0
        %v743 = vadd.f32 %v479, %v742
        %744 = vmatmul.f32.gmra.mxu0 %v370
        %v745 = vpop.f32.mrf.mxu0
        %v746 = vadd.f32 %v484, %v745
        %747 = vmatmul.f32.gmra.mxu0 %v372
        %v748 = vpop.f32.mrf.mxu0
        %v749 = vadd.f32 %v489, %v748
        %750 = vmatmul.f32.gmra.mxu0 %v374
        %v751 = vpop.f32.mrf.mxu0
        %v752 = vadd.f32 %v494, %v751
        %753 = vmatmul.f32.gmra.mxu0 %v376
        %v754 = vpop.f32.mrf.mxu0
        %v755 = vadd.f32 %v499, %v754
        %756 = vmatmul.f32.gmra.mxu0 %v378
        %v757 = vpop.f32.mrf.mxu0
        %v758 = vadd.f32 %v504, %v757
        %759 = vmatmul.f32.gmra.mxu0 %v380
        %v760 = vpop.f32.mrf.mxu0
        %v761 = vadd.f32 %v509, %v760
        %762 = vmatmul.f32.gmra.mxu0 %v382
        %v763 = vpop.f32.mrf.mxu0
        %v764 = vadd.f32 %v514, %v763
        %765 = vmatmul.f32.gmra.mxu0 %v384
        %v766 = vpop.f32.mrf.mxu0
        %v767 = vadd.f32 %v519, %v766
        %768 = vmatmul.f32.gmra.mxu0 %v386
        %v769 = vpop.f32.mrf.mxu0
        %v770 = vadd.f32 %v524, %v769
        %771 = vmatmul.f32.gmra.mxu0 %v388
        %v772 = vpop.f32.mrf.mxu0
        %v773 = vadd.f32 %v529, %v772
        %774 = vmatmul.f32.gmra.mxu0 %v390
        %v775 = vpop.f32.mrf.mxu0
        %v776 = vadd.f32 %v534, %v775
        %777 = vmatmul.f32.gmra.mxu0 %v392
        %v778 = vpop.f32.mrf.mxu0
        %v779 = vadd.f32 %v539, %v778
        %780 = vmatmul.f32.gmra.mxu0 %v394
        %v781 = vpop.f32.mrf.mxu0
        %v782 = vadd.f32 %v544, %v781
        %783 = vmatmul.f32.gmra.mxu0 %v396
        %v784 = vpop.f32.mrf.mxu0
        %v785 = vadd.f32 %v549, %v784
        %786 = vmatmul.f32.gmra.mxu0 %v398
        %v787 = vpop.f32.mrf.mxu0
        %v788 = vadd.f32 %v554, %v787
        %789 = vmatmul.f32.gmra.mxu0 %v400
        %v790 = vpop.f32.mrf.mxu0
        %v791 = vadd.f32 %v559, %v790
        %792 = vmatmul.f32.gmra.mxu0 %v402
        %v793 = vpop.f32.mrf.mxu0
        %v794 = vadd.f32 %v564, %v793
        %795 = vmatmul.f32.gmra.mxu0 %v404
        %v796 = vpop.f32.mrf.mxu0
        %v797 = vadd.f32 %v569, %v796
        %798 = vmatmul.f32.gmra.mxu0 %v406
        %v799 = vpop.f32.mrf.mxu0
        %v800 = vadd.f32 %v574, %v799
        %801 = vmatmul.f32.gmra.mxu0 %v408
        %v802 = vpop.f32.mrf.mxu0
        %v803 = vadd.f32 %v579, %v802
        %804 = vmatmul.f32.gmra.mxu0 %v410
        %v805 = vpop.f32.mrf.mxu0
        %v806 = vadd.f32 %v584, %v805
        %807 = vmatmul.f32.gmra.mxu0 %v412
        %v808 = vpop.f32.mrf.mxu0
        %v809 = vadd.f32 %v589, %v808
        %810 = vmatmul.f32.gmra.mxu0 %v414
        %v811 = vpop.f32.mrf.mxu0
        %v812 = vadd.f32 %v594, %v811
        %813 = vmatmul.f32.gmra.mxu0 %v416
        %v814 = vpop.f32.mrf.mxu0
        %v815 = vadd.f32 %v599, %v814
        %816 = vmatmul.f32.gmra.mxu0 %v418
        %v817 = vpop.f32.mrf.mxu0
        %v818 = vadd.f32 %v604, %v817
        %819 = vmatmul.f32.gmra.mxu0 %v420
        %v820 = vpop.f32.mrf.mxu0
        %v821 = vadd.f32 %v609, %v820
        %822 = vmatmul.f32.gmra.mxu0 %v422
        %v823 = vpop.f32.mrf.mxu0
        %v824 = vadd.f32 %v614, %v823
        %825 = vdwg.mxu0
        %826 = vmatpush.msra.mxu0 0.0
        %827 = vmatpush.msra.mxu0 0.0
        %828 = vmatpush.msra.mxu0 0.0
        %829 = vmatpush.msra.mxu0 0.0
        %830 = vmatpush.msra.mxu0 0.0
        %831 = vmatpush.msra.mxu0 0.0
        %832 = vmatpush.msra.mxu0 0.0
        %833 = vmatpush.msra.mxu0 0.0
        %834 = vmatpush.msra.mxu0 %v358
        %835 = vmatpush.msra.mxu0 %v355
        %836 = vmatpush.msra.mxu0 %v352
        %837 = vmatpush.msra.mxu0 %v349
        %838 = vmatpush.msra.mxu0 %v346
        %839 = vmatpush.msra.mxu0 %v343
        %840 = vmatpush.msra.mxu0 %v340
        %841 = vmatpush.msra.mxu0 %v337
        %842 = vmatmul.f32.gmra.mxu0 %v618
        %v843 = vpop.f32.mrf.mxu0
        %v844 = vadd.f32 %v731, %v843
        %845 = vmatmul.f32.gmra.mxu0 %v621
        %v846 = vpop.f32.mrf.mxu0
        %v847 = vadd.f32 %v734, %v846
        %848 = vmatmul.f32.gmra.mxu0 %v624
        %v849 = vpop.f32.mrf.mxu0
        %v850 = vadd.f32 %v737, %v849
        %851 = vmatmul.f32.gmra.mxu0 %v627
        %v852 = vpop.f32.mrf.mxu0
        %v853 = vadd.f32 %v740, %v852
        %854 = vmatmul.f32.gmra.mxu0 %v630
        %v855 = vpop.f32.mrf.mxu0
        %v856 = vadd.f32 %v743, %v855
        %857 = vmatmul.f32.gmra.mxu0 %v633
        %v858 = vpop.f32.mrf.mxu0
        %v859 = vadd.f32 %v746, %v858
        %860 = vmatmul.f32.gmra.mxu0 %v636
        %v861 = vpop.f32.mrf.mxu0
        %v862 = vadd.f32 %v749, %v861
        %863 = vmatmul.f32.gmra.mxu0 %v639
        %v864 = vpop.f32.mrf.mxu0
        %v865 = vadd.f32 %v752, %v864
        %866 = vmatmul.f32.gmra.mxu0 %v642
        %v867 = vpop.f32.mrf.mxu0
        %v868 = vadd.f32 %v755, %v867
        %869 = vmatmul.f32.gmra.mxu0 %v645
        %v870 = vpop.f32.mrf.mxu0
        %v871 = vadd.f32 %v758, %v870
        %872 = vmatmul.f32.gmra.mxu0 %v648
        %v873 = vpop.f32.mrf.mxu0
        %v874 = vadd.f32 %v761, %v873
        %875 = vmatmul.f32.gmra.mxu0 %v651
        %v876 = vpop.f32.mrf.mxu0
        %v877 = vadd.f32 %v764, %v876
        %878 = vmatmul.f32.gmra.mxu0 %v654
        %v879 = vpop.f32.mrf.mxu0
        %v880 = vadd.f32 %v767, %v879
        %881 = vmatmul.f32.gmra.mxu0 %v657
        %v882 = vpop.f32.mrf.mxu0
        %v883 = vadd.f32 %v770, %v882
        %884 = vmatmul.f32.gmra.mxu0 %v660
        %v885 = vpop.f32.mrf.mxu0
        %v886 = vadd.f32 %v773, %v885
        %887 = vmatmul.f32.gmra.mxu0 %v663
        %v888 = vpop.f32.mrf.mxu0
        %v889 = vadd.f32 %v776, %v888
        %890 = vmatmul.f32.gmra.mxu0 %v666
        %v891 = vpop.f32.mrf.mxu0
        %v892 = vadd.f32 %v779, %v891
        %893 = vmatmul.f32.gmra.mxu0 %v669
        %v894 = vpop.f32.mrf.mxu0
        %v895 = vadd.f32 %v782, %v894
        %896 = vmatmul.f32.gmra.mxu0 %v672
        %v897 = vpop.f32.mrf.mxu0
        %v898 = vadd.f32 %v785, %v897
        %899 = vmatmul.f32.gmra.mxu0 %v675
        %v900 = vpop.f32.mrf.mxu0
        %v901 = vadd.f32 %v788, %v900
        %902 = vmatmul.f32.gmra.mxu0 %v678
        %v903 = vpop.f32.mrf.mxu0
        %v904 = vadd.f32 %v791, %v903
        %905 = vmatmul.f32.gmra.mxu0 %v681
        %v906 = vpop.f32.mrf.mxu0
        %v907 = vadd.f32 %v794, %v906
        %908 = vmatmul.f32.gmra.mxu0 %v684
        %v909 = vpop.f32.mrf.mxu0
        %v910 = vadd.f32 %v797, %v909
        %911 = vmatmul.f32.gmra.mxu0 %v687
        %v912 = vpop.f32.mrf.mxu0
        %v913 = vadd.f32 %v800, %v912
        %914 = vmatmul.f32.gmra.mxu0 %v690
        %v915 = vpop.f32.mrf.mxu0
        %v916 = vadd.f32 %v803, %v915
        %917 = vmatmul.f32.gmra.mxu0 %v693
        %v918 = vpop.f32.mrf.mxu0
        %v919 = vadd.f32 %v806, %v918
        %920 = vmatmul.f32.gmra.mxu0 %v696
        %v921 = vpop.f32.mrf.mxu0
        %v922 = vadd.f32 %v809, %v921
        %923 = vmatmul.f32.gmra.mxu0 %v699
        %v924 = vpop.f32.mrf.mxu0
        %v925 = vadd.f32 %v812, %v924
        %926 = vmatmul.f32.gmra.mxu0 %v702
        %v927 = vpop.f32.mrf.mxu0
        %v928 = vadd.f32 %v815, %v927
        %929 = vmatmul.f32.gmra.mxu0 %v705
        %v930 = vpop.f32.mrf.mxu0
        %v931 = vadd.f32 %v818, %v930
        %932 = vmatmul.f32.gmra.mxu0 %v708
        %v933 = vpop.f32.mrf.mxu0
        %v934 = vadd.f32 %v821, %v933
        %935 = vmatmul.f32.gmra.mxu0 %v711
        %v936 = vpop.f32.mrf.mxu0
        %v937 = vadd.f32 %v824, %v936
        %938 = vdwg.mxu0
        %vm939 = vcmask 261120
        %940 = vst.msk [vmem:[%s190] sm:$0xff] %vm939, %v844
        %941 = vst.msk [vmem:[%s190 + $0x8] sm:$0xff] %vm939, %v847
        %942 = vst.msk [vmem:[%s190 + $0x10] sm:$0xff] %vm939, %v850
        %943 = vst.msk [vmem:[%s190 + $0x18] sm:$0xff] %vm939, %v853
        %944 = vst.msk [vmem:[%s190 + $0x20] sm:$0xff] %vm939, %v856
        %945 = vst.msk [vmem:[%s190 + $0x28] sm:$0xff] %vm939, %v859
        %946 = vst.msk [vmem:[%s190 + $0x30] sm:$0xff] %vm939, %v862
        %947 = vst.msk [vmem:[%s190 + $0x38] sm:$0xff] %vm939, %v865
        %948 = vst.msk [vmem:[%s190 + $0x40] sm:$0xff] %vm939, %v868
        %949 = vst.msk [vmem:[%s190 + $0x48] sm:$0xff] %vm939, %v871
        %950 = vst.msk [vmem:[%s190 + $0x50] sm:$0xff] %vm939, %v874
        %951 = vst.msk [vmem:[%s190 + $0x58] sm:$0xff] %vm939, %v877
        %952 = vst.msk [vmem:[%s190 + $0x60] sm:$0xff] %vm939, %v880
        %953 = vst.msk [vmem:[%s190 + $0x68] sm:$0xff] %vm939, %v883
        %954 = vst.msk [vmem:[%s190 + $0x70] sm:$0xff] %vm939, %v886
        %955 = vst.msk [vmem:[%s190 + $0x78] sm:$0xff] %vm939, %v889
        %956 = vst.msk [vmem:[%s190 + $0x80] sm:$0xff] %vm939, %v892
        %957 = vst.msk [vmem:[%s190 + $0x88] sm:$0xff] %vm939, %v895
        %958 = vst.msk [vmem:[%s190 + $0x90] sm:$0xff] %vm939, %v898
        %959 = vst.msk [vmem:[%s190 + $0x98] sm:$0xff] %vm939, %v901
        %960 = vst.msk [vmem:[%s190 + $0xa0] sm:$0xff] %vm939, %v904
        %961 = vst.msk [vmem:[%s190 + $0xa8] sm:$0xff] %vm939, %v907
        %962 = vst.msk [vmem:[%s190 + $0xb0] sm:$0xff] %vm939, %v910
        %963 = vst.msk [vmem:[%s190 + $0xb8] sm:$0xff] %vm939, %v913
        %964 = vst.msk [vmem:[%s190 + $0xc0] sm:$0xff] %vm939, %v916
        %965 = vst.msk [vmem:[%s190 + $0xc8] sm:$0xff] %vm939, %v919
        %966 = vst.msk [vmem:[%s190 + $0xd0] sm:$0xff] %vm939, %v922
        %967 = vst.msk [vmem:[%s190 + $0xd8] sm:$0xff] %vm939, %v925
        %968 = vst.msk [vmem:[%s190 + $0xe0] sm:$0xff] %vm939, %v928
        %969 = vst.msk [vmem:[%s190 + $0xe8] sm:$0xff] %vm939, %v931
        %970 = vst.msk [vmem:[%s190 + $0xf0] sm:$0xff] %vm939, %v934
        %971 = vst.msk [vmem:[%s190 + $0xf8] sm:$0xff] %vm939, %v937
        %s972 = sand.u32 %s115, 1
        %s973 = scalar_lea.sflag [#allocation3], %s972
        %s974 = sand.u32 %s115, 1
        %s975 = smul.addr %s974, 256
        %s976 = scalar_lea.vmem [#allocation2], %s975
        // Predicated region
        $region37: #{upsample_conv_layer.1} parent=35 // pred_check
          %p977 = pneg %p125
        $region38: #{upsample_conv_layer.1} parent=35 // pred_check_branch
          %979 = sbr.rel (%p977) target = $region40
        $region39: #{upsample_conv_layer.1} parent=35 // pred_region
          %981 = vsyncadd %s973, 0
          %s982 = smul.addr %s18, 32
          %s983 = smul.addr %s982, 8
          %s984 = scalar_lea.hbm %s4, %s983
          %s985 = sshll.u32 %s976, 4
          %s986 = int_to_ptr.vmem [resolvable:$true] %s985
          %s987 = sshll.u32 %s984, 4
          %s988 = int_to_ptr.hbm [resolvable:$true] %s987
          %993 = dma.vmem_to_hbm [thread:$0]  %s986, 4096, %s988, %s973, 128, 128, 8
        $region40: #{upsample_conv_layer.1} parent=35 // pred_fallthru
          _
      $region36: #{upsample_conv_layer.1} parent=5 // pred_fallthru
        _
      %p994 = scmp.le.s32.totalorder 2, %s13
      // Predicated region
      $region41: #{upsample_conv_layer.1} parent=5 // pred_check
        %p995 = pneg %p994
      $region42: #{upsample_conv_layer.1} parent=5 // pred_check_branch
        %997 = sbr.rel (%p995) target = $region44
      $region43: #{upsample_conv_layer.1} parent=5 // pred_region
        %s998 = ssub.s32 %s13, 2
        // Predicated region
        $region45: #{upsample_conv_layer.1} parent=43 // pred_check
          %p999 = pneg %p131
        $region46: #{upsample_conv_layer.1} parent=43 // pred_check_branch
          %1001 = sbr.rel (%p999) target = $region48
        $region47: #{upsample_conv_layer.1} parent=43 // pred_region
          %s1002 = sand.u32 %s116, 1
          %s1003 = scalar_lea.sflag [#allocation3], %s1002
          %s1004 = sand.u32 %s116, 1
          %s1005 = smul.addr %s1004, 256
          %s1006 = scalar_lea.vmem [#allocation2], %s1005
          %1008 = dma.done %s1003, 4096
        $region48: #{upsample_conv_layer.1} parent=43 // pred_fallthru
          _
      $region44: #{upsample_conv_layer.1} parent=5 // pred_fallthru
        _
    $region6: #{upsample_conv_layer.1} parent=1 // loop_footer
      %s17 = sadd.s32 1, %s13
    $region7: #{upsample_conv_layer.1} parent=1 // loop_footer_branch
      %12 = sbr.rel target = $region3
    $region8: #{upsample_conv_layer.1} parent=1 // loop_exit
      _
    %1009 = vsyncpa [#allocation3], 1
    %s1010 = scalar_lea.sflag [#allocation3], 1
    %1011 = vsyncpa %s1010, 1

</llo_original>
